<compile_context>
chip_gen: v5e
topology: v5e:2x2
jax: 0.10.0
libtpu: 0.0.40
codegen_flags: <defaults>
</compile_context>

<pallas_src>
import jax
import jax.numpy as jnp
from jax.experimental import pallas as pl
from jax.experimental.pallas import tpu as pltpu

LATENT_DIM = 64     # matches `latent_dim = 64` / `noise_dim = 64` in the module
HIDDEN1 = 256
HIDDEN2 = 512
INPUT_DIM = 128     # module's `input_dim` ctor arg is unspecified; 128 = lane-dense choice


def _round_up(x, m):
    return ((x + m - 1) // m) * m


# ---------------------------------------------------------------------------
# Kernel: fused 3-layer MLP for one batch tile. Weights/biases are resident.
# ---------------------------------------------------------------------------
def decoder_kernel(z_ref, w1_ref, b1_ref, w2_ref, b2_ref, w3_ref, b3_ref, o_ref):
    # Layer 1: Linear(64, 256) + ReLU. f32 accumulation on the MXU; bias add on VPU.
    h1 = jnp.dot(z_ref[...], w1_ref[...], preferred_element_type=jnp.float32)
    h1 = jnp.maximum(h1 + b1_ref[...], 0.0).astype(w2_ref.dtype)

    # Layer 2: Linear(256, 512) + ReLU.
    h2 = jnp.dot(h1, w2_ref[...], preferred_element_type=jnp.float32)
    h2 = jnp.maximum(h2 + b2_ref[...], 0.0).astype(w3_ref.dtype)

    # Layer 3: Linear(512, input_dim) + Sigmoid.
    logits = jnp.dot(h2, w3_ref[...], preferred_element_type=jnp.float32) + b3_ref[...]
    o_ref[...] = jax.nn.sigmoid(logits).astype(o_ref.dtype)


# ---------------------------------------------------------------------------
# One-time parameter preparation (hoisted out of the per-call path).
# ---------------------------------------------------------------------------
def prepare_decoder_params(w1, b1, w2, b2, w3, b3, *, compute_dtype=jnp.bfloat16):
    """Cast weights to the MXU compute dtype once; biases stay f32 (post-acc add)."""
    w1c = jnp.asarray(w1, compute_dtype)
    w2c = jnp.asarray(w2, compute_dtype)
    w3c = jnp.asarray(w3, compute_dtype)
    b1c = jnp.asarray(b1, jnp.float32).reshape(1, HIDDEN1)
    b2c = jnp.asarray(b2, jnp.float32).reshape(1, HIDDEN2)
    b3c = jnp.asarray(b3, jnp.float32).reshape(1, INPUT_DIM)
    return (w1c, b1c, w2c, b2c, w3c, b3c)


def _pick_tile(B, batch_tile, align, num_cores):
    """Batch tile: aligned, <= batch_tile, grid length a multiple of num_cores."""
    if B <= align * num_cores:
        return max(_round_up(B, align), align)          # tiny batch: single step
    steps = pl.cdiv(B, batch_tile)
    steps = _round_up(steps, num_cores)                 # balance across TensorCores
    tile = _round_up(pl.cdiv(B, steps), align)
    tile = min(tile, _round_up(batch_tile, align))
    return max(tile, align)


def _vmem_limit_bytes(tile, compute_dtype, out_dtype):
    cb = jnp.dtype(compute_dtype).itemsize
    ob = jnp.dtype(out_dtype).itemsize
    weights = (LATENT_DIM * HIDDEN1 + HIDDEN1 * HIDDEN2 + HIDDEN2 * INPUT_DIM) * cb
    biases = (HIDDEN1 + HIDDEN2 + INPUT_DIM) * 4
    io = 2 * tile * (LATENT_DIM * cb + INPUT_DIM * ob)                 # double-buffered z / out
    acts = tile * ((HIDDEN1 + HIDDEN2 + INPUT_DIM) * 4 + (HIDDEN1 + HIDDEN2) * cb)
    budget = weights + biases + io + acts
    # 2x headroom for compiler temporaries, capped at v7x physical VMEM (64 MiB).
    return int(min(2 * budget + (4 << 20), 64 << 20))


# ---------------------------------------------------------------------------
# Forward pass wrapper.
# ---------------------------------------------------------------------------
def decoder_forward(z, params, *, batch_tile=1024, out_dtype=jnp.float32, num_cores=2):
    """Fused Pallas forward pass. `params` comes from prepare_decoder_params()."""
    w1, b1, w2, b2, w3, b3 = params
    B, D = z.shape
    assert D == LATENT_DIM

    compute_dtype = w1.dtype
    align = 16 if jnp.dtype(compute_dtype).itemsize == 2 else 8
    tile = _pick_tile(B, batch_tile, align, num_cores)
    grid = (pl.cdiv(B, tile),)   # ragged final block bounded by Pallas; no wrapper padding

    z_c = z.astype(compute_dtype)   # single cast; no zero-fill / scatter / re-cast

    resident = lambda shape: pl.BlockSpec(shape, lambda i: (0, 0))

    out = pl.pallas_call(
        decoder_kernel,
        out_shape=jax.ShapeDtypeStruct((B, INPUT_DIM), out_dtype),
        grid_spec=pltpu.PrefetchScalarGridSpec(
            num_scalar_prefetch=0,
            grid=grid,
            in_specs=[
                pl.BlockSpec((tile, LATENT_DIM), lambda i: (i, 0)),  # z tile (last dim = full 64)
                resident((LATENT_DIM, HIDDEN1)),                      # W1
                resident((1, HIDDEN1)),                               # b1
                resident((HIDDEN1, HIDDEN2)),                         # W2
                resident((1, HIDDEN2)),                               # b2
                resident((HIDDEN2, INPUT_DIM)),                       # W3
                resident((1, INPUT_DIM)),                             # b3
            ],
            out_specs=pl.BlockSpec((tile, INPUT_DIM), lambda i: (i, 0)),
        ),
        compiler_params=pltpu.CompilerParams(
            dimension_semantics=("parallel",),
            vmem_limit_bytes=_vmem_limit_bytes(tile, compute_dtype, out_dtype),
        ),
    )(z_c, w1, b1, w2, b2, w3, b3)

    return out


# ---------------------------------------------------------------------------
# Reference + synthetic init for the self-test.
# ---------------------------------------------------------------------------
def init_params(key):
    k1, k2, k3, k4, k5, k6 = jax.random.split(key, 6)

    def lin(kw, kb, fan_in, fan_out):
        bound = 1.0 / jnp.sqrt(fan_in)
        w = jax.random.uniform(kw, (fan_in, fan_out), jnp.float32, -bound, bound)
        b = jax.random.uniform(kb, (fan_out,), jnp.float32, -bound, bound)
        return w, b

    w1, b1 = lin(k1, k2, LATENT_DIM, HIDDEN1)
    w2, b2 = lin(k3, k4, HIDDEN1, HIDDEN2)
    w3, b3 = lin(k5, k6, HIDDEN2, INPUT_DIM)
    return w1, b1, w2, b2, w3, b3


def reference_forward(z, w1, b1, w2, b2, w3, b3):
    h1 = jnp.maximum(z @ w1 + b1, 0.0)
    h2 = jnp.maximum(h1 @ w2 + b2, 0.0)
    return jax.nn.sigmoid(h2 @ w3 + b3)


if __name__ == "__main__":
    key = jax.random.PRNGKey(0)
    kz, kp, kz2 = jax.random.split(key, 3)
    raw = init_params(kp)

    fwd = jax.jit(decoder_forward,
                  static_argnames=("batch_tile", "out_dtype", "num_cores"))

    # --- f32 path, small batch: strict correctness check (single grid step). ---
    params_f32 = prepare_decoder_params(*raw, compute_dtype=jnp.float32)
    batch = 16
    z = jax.random.normal(kz, (batch, LATENT_DIM), dtype=jnp.float32)
    out = jax.block_until_ready(fwd(z, params_f32))
    ref = reference_forward(z, *raw)
    assert out.shape == (batch, INPUT_DIM)
    assert jnp.allclose(out, ref, atol=1e-5, rtol=1e-5)

    # --- bf16 default path, ragged batch (module's num_new_samples=100),
    #     multi-step grid exercising the bounded final block. ---
    params_bf16 = prepare_decoder_params(*raw)          # compute_dtype=bf16
    batch2 = 100
    z2 = jax.random.normal(kz2, (batch2, LATENT_DIM), dtype=jnp.float32)
    out2 = jax.block_until_ready(fwd(z2, params_bf16, batch_tile=1024))
    ref2 = reference_forward(z2, *raw)
    assert out2.shape == (batch2, INPUT_DIM)
    assert bool(jnp.all(jnp.isfinite(out2)))
    assert jnp.allclose(out2, ref2, atol=5e-2)          # bf16 weights/activations, f32 accum

    print("KERNEL_OK")
</pallas_src>

<mosaic_0001>
module attributes {stable_mosaic.version = 11 : i64} {
  func.func @decoder_kernel(%arg0: i32, %arg1: memref<16x64xf32, #tpu.memory_space<vmem>>, %arg2: memref<64x256xf32, #tpu.memory_space<vmem>>, %arg3: memref<1x256xf32, #tpu.memory_space<vmem>>, %arg4: memref<256x512xf32, #tpu.memory_space<vmem>>, %arg5: memref<1x512xf32, #tpu.memory_space<vmem>>, %arg6: memref<512x128xf32, #tpu.memory_space<vmem>>, %arg7: memref<1x128xf32, #tpu.memory_space<vmem>>, %arg8: memref<16x128xf32, #tpu.memory_space<vmem>>) attributes {dimension_semantics = [#tpu.dimension_semantics<parallel>], iteration_bounds = array<i64: 1>, scalar_prefetch = 0 : i64, scratch_operands = 0 : i64, tpu.core_type = #tpu.core_type<tc>, window_params = [{transform_indices = @transform_0, window_bounds = array<i64: 16, 64>}, {pipeline_mode = #tpu.pipeline_mode<synchronous>, transform_indices = @transform_1, window_bounds = array<i64: 64, 256>}, {pipeline_mode = #tpu.pipeline_mode<synchronous>, transform_indices = @transform_2, window_bounds = array<i64: 1, 256>}, {pipeline_mode = #tpu.pipeline_mode<synchronous>, transform_indices = @transform_3, window_bounds = array<i64: 256, 512>}, {pipeline_mode = #tpu.pipeline_mode<synchronous>, transform_indices = @transform_4, window_bounds = array<i64: 1, 512>}, {pipeline_mode = #tpu.pipeline_mode<synchronous>, transform_indices = @transform_5, window_bounds = array<i64: 512, 128>}, {pipeline_mode = #tpu.pipeline_mode<synchronous>, transform_indices = @transform_6, window_bounds = array<i64: 1, 128>}, {transform_indices = @transform_7, window_bounds = array<i64: 16, 128>}]} {
    %c0 = arith.constant 0 : index
    %c0_0 = arith.constant 0 : index
    %0 = vector.load %arg1[%c0, %c0_0] : memref<16x64xf32, #tpu.memory_space<vmem>>, vector<16x64xf32>
    %c0_1 = arith.constant 0 : index
    %c0_2 = arith.constant 0 : index
    %1 = vector.load %arg2[%c0_1, %c0_2] : memref<64x256xf32, #tpu.memory_space<vmem>>, vector<64x256xf32>
    %cst = arith.constant dense<0.000000e+00> : vector<16x256xf32>
    %2 = tpu.matmul %0, %1, %cst {dimension_numbers = #tpu.dot_dimension_numbers<[1], [0], [0], [1], [0, 0, 1, 1], [], []>} : vector<16x64xf32>, vector<64x256xf32>, vector<16x256xf32> -> vector<16x256xf32>
    %c0_3 = arith.constant 0 : index
    %c0_4 = arith.constant 0 : index
    %3 = vector.load %arg3[%c0_3, %c0_4] : memref<1x256xf32, #tpu.memory_space<vmem>>, vector<1x256xf32>
    %4 = vector.broadcast %3 : vector<1x256xf32> to vector<16x256xf32>
    %5 = arith.addf %2, %4 : vector<16x256xf32>
    %cst_5 = arith.constant 0.000000e+00 : f32
    %6 = vector.broadcast %cst_5 : f32 to vector<16x256xf32>
    %7 = arith.maximumf %5, %6 : vector<16x256xf32>
    %c0_6 = arith.constant 0 : index
    %c0_7 = arith.constant 0 : index
    %8 = vector.load %arg4[%c0_6, %c0_7] : memref<256x512xf32, #tpu.memory_space<vmem>>, vector<256x512xf32>
    %cst_8 = arith.constant dense<0.000000e+00> : vector<16x512xf32>
    %9 = tpu.matmul %7, %8, %cst_8 {dimension_numbers = #tpu.dot_dimension_numbers<[1], [0], [0], [1], [0, 0, 1, 1], [], []>} : vector<16x256xf32>, vector<256x512xf32>, vector<16x512xf32> -> vector<16x512xf32>
    %c0_9 = arith.constant 0 : index
    %c0_10 = arith.constant 0 : index
    %10 = vector.load %arg5[%c0_9, %c0_10] : memref<1x512xf32, #tpu.memory_space<vmem>>, vector<1x512xf32>
    %11 = vector.broadcast %10 : vector<1x512xf32> to vector<16x512xf32>
    %12 = arith.addf %9, %11 : vector<16x512xf32>
    %cst_11 = arith.constant 0.000000e+00 : f32
    %13 = vector.broadcast %cst_11 : f32 to vector<16x512xf32>
    %14 = arith.maximumf %12, %13 : vector<16x512xf32>
    %c0_12 = arith.constant 0 : index
    %c0_13 = arith.constant 0 : index
    %15 = vector.load %arg6[%c0_12, %c0_13] : memref<512x128xf32, #tpu.memory_space<vmem>>, vector<512x128xf32>
    %cst_14 = arith.constant dense<0.000000e+00> : vector<16x128xf32>
    %16 = tpu.matmul %14, %15, %cst_14 {dimension_numbers = #tpu.dot_dimension_numbers<[1], [0], [0], [1], [0, 0, 1, 1], [], []>} : vector<16x512xf32>, vector<512x128xf32>, vector<16x128xf32> -> vector<16x128xf32>
    %c0_15 = arith.constant 0 : index
    %c0_16 = arith.constant 0 : index
    %17 = vector.load %arg7[%c0_15, %c0_16] : memref<1x128xf32, #tpu.memory_space<vmem>>, vector<1x128xf32>
    %18 = vector.broadcast %17 : vector<1x128xf32> to vector<16x128xf32>
    %19 = arith.addf %16, %18 : vector<16x128xf32>
    %20 = arith.negf %19 : vector<16x128xf32>
    %21 = math.exp %20 : vector<16x128xf32>
    %cst_17 = arith.constant 1.000000e+00 : f32
    %22 = vector.broadcast %cst_17 : f32 to vector<16x128xf32>
    %23 = arith.addf %22, %21 : vector<16x128xf32>
    %24 = arith.divf %22, %23 : vector<16x128xf32>
    %c0_18 = arith.constant 0 : index
    %c0_19 = arith.constant 0 : index
    %25 = vector.load %arg8[%c0_18, %c0_19] : memref<16x128xf32, #tpu.memory_space<vmem>>, vector<16x128xf32>
    tpu.vector_store %arg8[%c0_18, %c0_19], %24 {strides = array<i32>} : memref<16x128xf32, #tpu.memory_space<vmem>>, vector<16x128xf32>,
    return
  }
  func.func @transform_0(%arg0: i32) -> (i32, i32) {
    %c0_i32 = arith.constant 0 : i32
    %c0_i32_0 = arith.constant 0 : i32
    return %arg0, %c0_i32 : i32, i32
  }
  func.func @transform_1(%arg0: i32) -> (i32, i32) {
    %c0_i32 = arith.constant 0 : i32
    %c0_i32_0 = arith.constant 0 : i32
    %c0_i32_1 = arith.constant 0 : i32
    return %c0_i32, %c0_i32_0 : i32, i32
  }
  func.func @transform_2(%arg0: i32) -> (i32, i32) {
    %c0_i32 = arith.constant 0 : i32
    %c0_i32_0 = arith.constant 0 : i32
    %c0_i32_1 = arith.constant 0 : i32
    return %c0_i32, %c0_i32_0 : i32, i32
  }
  func.func @transform_3(%arg0: i32) -> (i32, i32) {
    %c0_i32 = arith.constant 0 : i32
    %c0_i32_0 = arith.constant 0 : i32
    %c0_i32_1 = arith.constant 0 : i32
    return %c0_i32, %c0_i32_0 : i32, i32
  }
  func.func @transform_4(%arg0: i32) -> (i32, i32) {
    %c0_i32 = arith.constant 0 : i32
    %c0_i32_0 = arith.constant 0 : i32
    %c0_i32_1 = arith.constant 0 : i32
    return %c0_i32, %c0_i32_0 : i32, i32
  }
  func.func @transform_5(%arg0: i32) -> (i32, i32) {
    %c0_i32 = arith.constant 0 : i32
    %c0_i32_0 = arith.constant 0 : i32
    %c0_i32_1 = arith.constant 0 : i32
    return %c0_i32, %c0_i32_0 : i32, i32
  }
  func.func @transform_6(%arg0: i32) -> (i32, i32) {
    %c0_i32 = arith.constant 0 : i32
    %c0_i32_0 = arith.constant 0 : i32
    %c0_i32_1 = arith.constant 0 : i32
    return %c0_i32, %c0_i32_0 : i32, i32
  }
  func.func @transform_7(%arg0: i32) -> (i32, i32) {
    %c0_i32 = arith.constant 0 : i32
    %c0_i32_0 = arith.constant 0 : i32
    return %arg0, %c0_i32 : i32, i32
  }
}

</mosaic_0001>

<llo_original>
// kernel: decoder_forward.1
$region0: #{decoder_forward.1}
  #allocation0 [shape = 'u32[]', space=smem, size = 0x4, offset = 0x4, fixed_abs, tag = 'smem constant byte address 0x4 - core index']
  #allocation1 [shape = 'u32[72,128]{1,0:T(1,128)}', space=vmem, size = 0x9000, scoped, tag = 'internal scratch']
  %s0 = inlined_call_operand.hbm [shape: f32[16,64], index: 0, kind: input, shape index: {}]
  %s1 = inlined_call_operand.hbm [shape: f32[64,256], index: 1, kind: input, shape index: {}]
  %s2 = inlined_call_operand.hbm [shape: f32[1,256], index: 2, kind: input, shape index: {}]
  %s3 = inlined_call_operand.hbm [shape: f32[256,512], index: 3, kind: input, shape index: {}]
  %s4 = inlined_call_operand.hbm [shape: f32[1,512], index: 4, kind: input, shape index: {}]
  %s5 = inlined_call_operand.hbm [shape: f32[512,128], index: 5, kind: input, shape index: {}]
  %s6 = inlined_call_operand.vmem [shape: f32[1,128], index: 6, kind: input, shape index: {}]
  %s7 = inlined_call_operand.hbm [shape: f32[16,128], index: 7, kind: output, shape index: {}]
  %s8 = sld [smem:[#allocation0]]
  $region62: #{decoder_forward.1} parent=0
    _
  %s10 = ssub.s32 1, %s8
  %s11 = scalar_select 0, %s10, %s8
  $region1: #{decoder_forward.1} parent=0
    #allocation2 [shape = 'u8[8192]{0}', space=vmem, size = 0x2000, scoped, tag = 'input window, operand 0, single buffered']
    #allocation3 [shape = 's32[1]{0}', space=sflag, size = 0x4, scoped, tag = 'scoped memory for decoder_forward.1']
    #allocation4 [shape = 's32[1]{0}', space=sflag, size = 0x4, scoped, tag = 'scoped memory for decoder_forward.1']
    #allocation5 [shape = 'u8[65536]{0}', space=vmem, size = 0x10000, scoped, tag = 'input window, operand 1, single buffered']
    #allocation6 [shape = 's32[1]{0}', space=sflag, size = 0x4, scoped, tag = 'scoped memory for decoder_forward.1']
    #allocation7 [shape = 'u8[1024]{0}', space=vmem, size = 0x400, scoped, tag = 'input window, operand 2, single buffered']
    #allocation8 [shape = 'u8[524288]{0}', space=vmem, size = 0x80000, scoped, tag = 'input window, operand 3, single buffered']
    #allocation9 [shape = 's32[1]{0}', space=sflag, size = 0x4, scoped, tag = 'scoped memory for decoder_forward.1']
    #allocation10 [shape = 'u8[2048]{0}', space=vmem, size = 0x800, scoped, tag = 'input window, operand 4, single buffered']
    #allocation11 [shape = 'u8[262144]{0}', space=vmem, size = 0x40000, scoped, tag = 'input window, operand 5, single buffered']
    #allocation12 [shape = 's32[1]{0}', space=sflag, size = 0x4, scoped, tag = 'scoped memory for decoder_forward.1']
    #allocation13 [shape = 'u8[8192]{0}', space=vmem, size = 0x2000, scoped, tag = 'output window, operand 0, single buffered']
    %12 = vsyncpa [#allocation3], 0
    %13 = vsyncpa [#allocation6], 0
    %14 = vsyncpa [#allocation9], 0
    %15 = vsyncpa [#allocation12], 0
    %16 = vsyncpa [#allocation4], 0
    // Predicated region
    $region2: #{decoder_forward.1} parent=1 // pred_check
      _
    $region3: #{decoder_forward.1} parent=1 // pred_check_branch
      %18 = sbr.rel (0) target = $region5
    $region4: #{decoder_forward.1} parent=1 // pred_region
      %20 = vsyncadd [#allocation3], 0
      %s21 = sshll.u32 %s0, 4
      %s22 = int_to_ptr.hbm [resolvable:$true] %s21
      %s23 = sshll.u32 [#allocation2], 4
      %s24 = int_to_ptr.vmem [resolvable:$true] %s23
      %29 = dma.hbm_to_vmem [thread:$0]  %s22, 256, %s24, [#allocation3], 128, 128, 8
    $region5: #{decoder_forward.1} parent=1 // pred_fallthru
      _
    // Predicated region
    $region6: #{decoder_forward.1} parent=1 // pred_check
      _
    $region7: #{decoder_forward.1} parent=1 // pred_check_branch
      %31 = sbr.rel (0) target = $region9
    $region8: #{decoder_forward.1} parent=1 // pred_region
      %33 = vsyncadd [#allocation6], 0
      %s34 = sshll.u32 %s1, 4
      %s35 = int_to_ptr.hbm [resolvable:$true] %s34
      %s36 = sshll.u32 [#allocation5], 4
      %s37 = int_to_ptr.vmem [resolvable:$true] %s36
      %42 = dma.hbm_to_vmem [thread:$0]  %s35, 2048, %s37, [#allocation6], 256, 256, 16
    $region9: #{decoder_forward.1} parent=1 // pred_fallthru
      _
    // Predicated region
    $region10: #{decoder_forward.1} parent=1 // pred_check
      _
    $region11: #{decoder_forward.1} parent=1 // pred_check_branch
      %44 = sbr.rel (0) target = $region13
    $region12: #{decoder_forward.1} parent=1 // pred_region
      %46 = vsyncadd [#allocation6], 0
      %s48 = sshll.u32 %s2, 4
      %s49 = int_to_ptr.hbm [resolvable:$true] %s48
      %s50 = sshll.u32 [#allocation7], 4
      %s51 = int_to_ptr.vmem [resolvable:$true] %s50
      %53 = dma.hbm_to_vmem [thread:$0]  %s49, 32, %s51, [#allocation6]
    $region13: #{decoder_forward.1} parent=1 // pred_fallthru
      _
    // Predicated region
    $region14: #{decoder_forward.1} parent=1 // pred_check
      _
    $region15: #{decoder_forward.1} parent=1 // pred_check_branch
      %55 = sbr.rel (0) target = $region17
    $region16: #{decoder_forward.1} parent=1 // pred_region
      %57 = vsyncadd [#allocation9], 0
      %s58 = sshll.u32 %s3, 4
      %s59 = int_to_ptr.hbm [resolvable:$true] %s58
      %s60 = sshll.u32 [#allocation8], 4
      %s61 = int_to_ptr.vmem [resolvable:$true] %s60
      %66 = dma.hbm_to_vmem [thread:$0]  %s59, 16384, %s61, [#allocation9], 512, 512, 32
    $region17: #{decoder_forward.1} parent=1 // pred_fallthru
      _
    // Predicated region
    $region18: #{decoder_forward.1} parent=1 // pred_check
      _
    $region19: #{decoder_forward.1} parent=1 // pred_check_branch
      %68 = sbr.rel (0) target = $region21
    $region20: #{decoder_forward.1} parent=1 // pred_region
      %70 = vsyncadd [#allocation9], 0
      %s72 = sshll.u32 %s4, 4
      %s73 = int_to_ptr.hbm [resolvable:$true] %s72
      %s74 = sshll.u32 [#allocation10], 4
      %s75 = int_to_ptr.vmem [resolvable:$true] %s74
      %77 = dma.hbm_to_vmem [thread:$0]  %s73, 64, %s75, [#allocation9]
    $region21: #{decoder_forward.1} parent=1 // pred_fallthru
      _
    // Predicated region
    $region22: #{decoder_forward.1} parent=1 // pred_check
      _
    $region23: #{decoder_forward.1} parent=1 // pred_check_branch
      %79 = sbr.rel (0) target = $region25
    $region24: #{decoder_forward.1} parent=1 // pred_region
      %81 = vsyncadd [#allocation12], 0
      %s82 = sshll.u32 %s5, 4
      %s83 = int_to_ptr.hbm [resolvable:$true] %s82
      %s84 = sshll.u32 [#allocation11], 4
      %s85 = int_to_ptr.vmem [resolvable:$true] %s84
      %90 = dma.hbm_to_vmem [thread:$0]  %s83, 8192, %s85, [#allocation12], 128, 128, 8
    $region25: #{decoder_forward.1} parent=1 // pred_fallthru
      _
    // Predicated region
    $region26: #{decoder_forward.1} parent=1 // pred_check
      _
    $region27: #{decoder_forward.1} parent=1 // pred_check_branch
      %92 = sbr.rel (0) target = $region29
    $region28: #{decoder_forward.1} parent=1 // pred_region
      _
    $region29: #{decoder_forward.1} parent=1 // pred_fallthru
      _
    // Predicated region
    $region30: #{decoder_forward.1} parent=1 // pred_check
      _
    $region31: #{decoder_forward.1} parent=1 // pred_check_branch
      %94 = sbr.rel (0) target = $region33
    $region32: #{decoder_forward.1} parent=1 // pred_region
      %96 = dma.done [#allocation3], 256
    $region33: #{decoder_forward.1} parent=1 // pred_fallthru
      _
    // Predicated region
    $region34: #{decoder_forward.1} parent=1 // pred_check
      _
    $region35: #{decoder_forward.1} parent=1 // pred_check_branch
      %98 = sbr.rel (0) target = $region37
    $region36: #{decoder_forward.1} parent=1 // pred_region
      %100 = dma.done [#allocation6], 2048
    $region37: #{decoder_forward.1} parent=1 // pred_fallthru
      _
    // Predicated region
    $region38: #{decoder_forward.1} parent=1 // pred_check
      _
    $region39: #{decoder_forward.1} parent=1 // pred_check_branch
      %102 = sbr.rel (0) target = $region41
    $region40: #{decoder_forward.1} parent=1 // pred_region
      %104 = dma.done [#allocation6], 32
    $region41: #{decoder_forward.1} parent=1 // pred_fallthru
      _
    // Predicated region
    $region42: #{decoder_forward.1} parent=1 // pred_check
      _
    $region43: #{decoder_forward.1} parent=1 // pred_check_branch
      %106 = sbr.rel (0) target = $region45
    $region44: #{decoder_forward.1} parent=1 // pred_region
      %108 = dma.done [#allocation9], 16384
    $region45: #{decoder_forward.1} parent=1 // pred_fallthru
      _
    // Predicated region
    $region46: #{decoder_forward.1} parent=1 // pred_check
      _
    $region47: #{decoder_forward.1} parent=1 // pred_check_branch
      %110 = sbr.rel (0) target = $region49
    $region48: #{decoder_forward.1} parent=1 // pred_region
      %112 = dma.done [#allocation9], 64
    $region49: #{decoder_forward.1} parent=1 // pred_fallthru
      _
    // Predicated region
    $region50: #{decoder_forward.1} parent=1 // pred_check
      _
    $region51: #{decoder_forward.1} parent=1 // pred_check_branch
      %114 = sbr.rel (0) target = $region53
    $region52: #{decoder_forward.1} parent=1 // pred_region
      %116 = dma.done [#allocation12], 8192
    $region53: #{decoder_forward.1} parent=1 // pred_fallthru
      _
    %v117 = vld [vmem:[#allocation2] sm:$0xff]
    %v118 = vld [vmem:[#allocation2 + $0x8] sm:$0xff]
    %v119 = vld [vmem:[#allocation5] sm:$0xff]
    %v120 = vld [vmem:[#allocation5 + $0x8] sm:$0xff]
    %v121 = vld [vmem:[#allocation5 + $0x10] sm:$0xff]
    %v122 = vld [vmem:[#allocation5 + $0x18] sm:$0xff]
    %v123 = vld [vmem:[#allocation5 + $0x20] sm:$0xff]
    %v124 = vld [vmem:[#allocation5 + $0x28] sm:$0xff]
    %v125 = vld [vmem:[#allocation5 + $0x30] sm:$0xff]
    %v126 = vld [vmem:[#allocation5 + $0x38] sm:$0xff]
    %v127 = vld [vmem:[#allocation5 + $0x40] sm:$0xff]
    %v128 = vld [vmem:[#allocation5 + $0x48] sm:$0xff]
    %v129 = vld [vmem:[#allocation5 + $0x50] sm:$0xff]
    %v130 = vld [vmem:[#allocation5 + $0x58] sm:$0xff]
    %v131 = vld [vmem:[#allocation5 + $0x60] sm:$0xff]
    %v132 = vld [vmem:[#allocation5 + $0x68] sm:$0xff]
    %v133 = vld [vmem:[#allocation5 + $0x70] sm:$0xff]
    %v134 = vld [vmem:[#allocation5 + $0x78] sm:$0xff]
    %v135 = vld [vmem:[#allocation7] sm:$0x3]
    %v137 = vperm.slane %v135, 0
    %v138 = vperm.slane %v135, 1
    %vm141 = vcmask 523264
    %v143 = vsel %vm141, %v117, 0
    %v146 = vsel %vm141, %v118, 0
    %148 = vmatpush.msra.mxu0 0.0
    %149 = vmatpush.msra.mxu0 0.0
    %150 = vmatpush.msra.mxu0 0.0
    %151 = vmatpush.msra.mxu0 0.0
    %152 = vmatpush.msra.mxu0 0.0
    %153 = vmatpush.msra.mxu0 0.0
    %154 = vmatpush.msra.mxu0 0.0
    %155 = vmatpush.msra.mxu0 0.0
    %156 = vmatpush.msra.mxu0 %v133
    %157 = vmatpush.msra.mxu0 %v131
    %158 = vmatpush.msra.mxu0 %v129
    %159 = vmatpush.msra.mxu0 %v127
    %160 = vmatpush.msra.mxu0 %v125
    %161 = vmatpush.msra.mxu0 %v123
    %162 = vmatpush.msra.mxu0 %v121
    %163 = vmatpush.msra.mxu0 %v119
    %164 = vmatmul.f32.gmra.mxu0 %v143
    %v165 = vpop.f32.mrf.mxu0
    %v166 = vadd.f32 %v137, %v165
    %167 = vmatmul.f32.gmra.mxu0 %v146
    %v168 = vpop.f32.mrf.mxu0
    %v169 = vadd.f32 %v137, %v168
    %170 = vdwg.mxu0
    %171 = vmatpush.msra.mxu0 0.0
    %172 = vmatpush.msra.mxu0 0.0
    %173 = vmatpush.msra.mxu0 0.0
    %174 = vmatpush.msra.mxu0 0.0
    %175 = vmatpush.msra.mxu0 0.0
    %176 = vmatpush.msra.mxu0 0.0
    %177 = vmatpush.msra.mxu0 0.0
    %178 = vmatpush.msra.mxu0 0.0
    %179 = vmatpush.msra.mxu0 %v134
    %180 = vmatpush.msra.mxu0 %v132
    %181 = vmatpush.msra.mxu0 %v130
    %182 = vmatpush.msra.mxu0 %v128
    %183 = vmatpush.msra.mxu0 %v126
    %184 = vmatpush.msra.mxu0 %v124
    %185 = vmatpush.msra.mxu0 %v122
    %186 = vmatpush.msra.mxu0 %v120
    %187 = vmatmul.f32.gmra.mxu0 %v143
    %v188 = vpop.f32.mrf.mxu0
    %v189 = vadd.f32 %v138, %v188
    %190 = vmatmul.f32.gmra.mxu0 %v146
    %v191 = vpop.f32.mrf.mxu0
    %v192 = vadd.f32 %v138, %v191
    %193 = vdwg.mxu0
    %v194 = vmax.f32 %v166, 0.0
    %v195 = vmax.f32 %v189, 0.0
    %v196 = vmax.f32 %v169, 0.0
    %v197 = vmax.f32 %v192, 0.0
    %v198 = vld [vmem:[#allocation8] sm:$0xff]
    %v199 = vld [vmem:[#allocation8 + $0x8] sm:$0xff]
    %v200 = vld [vmem:[#allocation8 + $0x10] sm:$0xff]
    %v201 = vld [vmem:[#allocation8 + $0x18] sm:$0xff]
    %v202 = vld [vmem:[#allocation8 + $0x20] sm:$0xff]
    %v203 = vld [vmem:[#allocation8 + $0x28] sm:$0xff]
    %v204 = vld [vmem:[#allocation8 + $0x30] sm:$0xff]
    %v205 = vld [vmem:[#allocation8 + $0x38] sm:$0xff]
    %v206 = vld [vmem:[#allocation8 + $0x40] sm:$0xff]
    %v207 = vld [vmem:[#allocation8 + $0x48] sm:$0xff]
    %v208 = vld [vmem:[#allocation8 + $0x50] sm:$0xff]
    %v209 = vld [vmem:[#allocation8 + $0x58] sm:$0xff]
    %v210 = vld [vmem:[#allocation8 + $0x60] sm:$0xff]
    %v211 = vld [vmem:[#allocation8 + $0x68] sm:$0xff]
    %v212 = vld [vmem:[#allocation8 + $0x70] sm:$0xff]
    %v213 = vld [vmem:[#allocation8 + $0x78] sm:$0xff]
    %v214 = vld [vmem:[#allocation8 + $0x80] sm:$0xff]
    %v215 = vld [vmem:[#allocation8 + $0x88] sm:$0xff]
    %v216 = vld [vmem:[#allocation8 + $0x90] sm:$0xff]
    %v217 = vld [vmem:[#allocation8 + $0x98] sm:$0xff]
    %v218 = vld [vmem:[#allocation8 + $0xa0] sm:$0xff]
    %v219 = vld [vmem:[#allocation8 + $0xa8] sm:$0xff]
    %v220 = vld [vmem:[#allocation8 + $0xb0] sm:$0xff]
    %v221 = vld [vmem:[#allocation8 + $0xb8] sm:$0xff]
    %v222 = vld [vmem:[#allocation8 + $0xc0] sm:$0xff]
    %v223 = vld [vmem:[#allocation8 + $0xc8] sm:$0xff]
    %v224 = vld [vmem:[#allocation8 + $0xd0] sm:$0xff]
    %v225 = vld [vmem:[#allocation8 + $0xd8] sm:$0xff]
    %v226 = vld [vmem:[#allocation8 + $0xe0] sm:$0xff]
    %v227 = vld [vmem:[#allocation8 + $0xe8] sm:$0xff]
    %v228 = vld [vmem:[#allocation8 + $0xf0] sm:$0xff]
    %v229 = vld [vmem:[#allocation8 + $0xf8] sm:$0xff]
    %v230 = vld [vmem:[#allocation8 + $0x100] sm:$0xff]
    %v231 = vld [vmem:[#allocation8 + $0x108] sm:$0xff]
    %v232 = vld [vmem:[#allocation8 + $0x110] sm:$0xff]
    %v233 = vld [vmem:[#allocation8 + $0x118] sm:$0xff]
    %v234 = vld [vmem:[#allocation8 + $0x120] sm:$0xff]
    %v235 = vld [vmem:[#allocation8 + $0x128] sm:$0xff]
    %v236 = vld [vmem:[#allocation8 + $0x130] sm:$0xff]
    %v237 = vld [vmem:[#allocation8 + $0x138] sm:$0xff]
    %v238 = vld [vmem:[#allocation8 + $0x140] sm:$0xff]
    %v239 = vld [vmem:[#allocation8 + $0x148] sm:$0xff]
    %v240 = vld [vmem:[#allocation8 + $0x150] sm:$0xff]
    %v241 = vld [vmem:[#allocation8 + $0x158] sm:$0xff]
    %v242 = vld [vmem:[#allocation8 + $0x160] sm:$0xff]
    %v243 = vld [vmem:[#allocation8 + $0x168] sm:$0xff]
    %v244 = vld [vmem:[#allocation8 + $0x170] sm:$0xff]
    %v245 = vld [vmem:[#allocation8 + $0x178] sm:$0xff]
    %v246 = vld [vmem:[#allocation8 + $0x180] sm:$0xff]
    %v247 = vld [vmem:[#allocation8 + $0x188] sm:$0xff]
    %v248 = vld [vmem:[#allocation8 + $0x190] sm:$0xff]
    %v249 = vld [vmem:[#allocation8 + $0x198] sm:$0xff]
    %v250 = vld [vmem:[#allocation8 + $0x1a0] sm:$0xff]
    %v251 = vld [vmem:[#allocation8 + $0x1a8] sm:$0xff]
    %v252 = vld [vmem:[#allocation8 + $0x1b0] sm:$0xff]
    %v253 = vld [vmem:[#allocation8 + $0x1b8] sm:$0xff]
    %v254 = vld [vmem:[#allocation8 + $0x1c0] sm:$0xff]
    %v255 = vld [vmem:[#allocation8 + $0x1c8] sm:$0xff]
    %v256 = vld [vmem:[#allocation8 + $0x1d0] sm:$0xff]
    %v257 = vld [vmem:[#allocation8 + $0x1d8] sm:$0xff]
    %v258 = vld [vmem:[#allocation8 + $0x1e0] sm:$0xff]
    %v259 = vld [vmem:[#allocation8 + $0x1e8] sm:$0xff]
    %v260 = vld [vmem:[#allocation8 + $0x1f0] sm:$0xff]
    %v261 = vld [vmem:[#allocation8 + $0x1f8] sm:$0xff]
    %v262 = vld [vmem:[#allocation8 + $0x200] sm:$0xff]
    %v263 = vld [vmem:[#allocation8 + $0x208] sm:$0xff]
    %v264 = vld [vmem:[#allocation8 + $0x210] sm:$0xff]
    %v265 = vld [vmem:[#allocation8 + $0x218] sm:$0xff]
    %v266 = vld [vmem:[#allocation8 + $0x220] sm:$0xff]
    %v267 = vld [vmem:[#allocation8 + $0x228] sm:$0xff]
    %v268 = vld [vmem:[#allocation8 + $0x230] sm:$0xff]
    %v269 = vld [vmem:[#allocation8 + $0x238] sm:$0xff]
    %v270 = vld [vmem:[#allocation8 + $0x240] sm:$0xff]
    %v271 = vld [vmem:[#allocation8 + $0x248] sm:$0xff]
    %v272 = vld [vmem:[#allocation8 + $0x250] sm:$0xff]
    %v273 = vld [vmem:[#allocation8 + $0x258] sm:$0xff]
    %v274 = vld [vmem:[#allocation8 + $0x260] sm:$0xff]
    %v275 = vld [vmem:[#allocation8 + $0x268] sm:$0xff]
    %v276 = vld [vmem:[#allocation8 + $0x270] sm:$0xff]
    %v277 = vld [vmem:[#allocation8 + $0x278] sm:$0xff]
    %v278 = vld [vmem:[#allocation8 + $0x280] sm:$0xff]
    %v279 = vld [vmem:[#allocation8 + $0x288] sm:$0xff]
    %v280 = vld [vmem:[#allocation8 + $0x290] sm:$0xff]
    %v281 = vld [vmem:[#allocation8 + $0x298] sm:$0xff]
    %v282 = vld [vmem:[#allocation8 + $0x2a0] sm:$0xff]
    %v283 = vld [vmem:[#allocation8 + $0x2a8] sm:$0xff]
    %v284 = vld [vmem:[#allocation8 + $0x2b0] sm:$0xff]
    %v285 = vld [vmem:[#allocation8 + $0x2b8] sm:$0xff]
    %v286 = vld [vmem:[#allocation8 + $0x2c0] sm:$0xff]
    %v287 = vld [vmem:[#allocation8 + $0x2c8] sm:$0xff]
    %v288 = vld [vmem:[#allocation8 + $0x2d0] sm:$0xff]
    %v289 = vld [vmem:[#allocation8 + $0x2d8] sm:$0xff]
    %v290 = vld [vmem:[#allocation8 + $0x2e0] sm:$0xff]
    %v291 = vld [vmem:[#allocation8 + $0x2e8] sm:$0xff]
    %v292 = vld [vmem:[#allocation8 + $0x2f0] sm:$0xff]
    %v293 = vld [vmem:[#allocation8 + $0x2f8] sm:$0xff]
    %v294 = vld [vmem:[#allocation8 + $0x300] sm:$0xff]
    %v295 = vld [vmem:[#allocation8 + $0x308] sm:$0xff]
    %v296 = vld [vmem:[#allocation8 + $0x310] sm:$0xff]
    %v297 = vld [vmem:[#allocation8 + $0x318] sm:$0xff]
    %v298 = vld [vmem:[#allocation8 + $0x320] sm:$0xff]
    %v299 = vld [vmem:[#allocation8 + $0x328] sm:$0xff]
    %v300 = vld [vmem:[#allocation8 + $0x330] sm:$0xff]
    %v301 = vld [vmem:[#allocation8 + $0x338] sm:$0xff]
    %v302 = vld [vmem:[#allocation8 + $0x340] sm:$0xff]
    %v303 = vld [vmem:[#allocation8 + $0x348] sm:$0xff]
    %v304 = vld [vmem:[#allocation8 + $0x350] sm:$0xff]
    %v305 = vld [vmem:[#allocation8 + $0x358] sm:$0xff]
    %v306 = vld [vmem:[#allocation8 + $0x360] sm:$0xff]
    %v307 = vld [vmem:[#allocation8 + $0x368] sm:$0xff]
    %v308 = vld [vmem:[#allocation8 + $0x370] sm:$0xff]
    %v309 = vld [vmem:[#allocation8 + $0x378] sm:$0xff]
    %v310 = vld [vmem:[#allocation8 + $0x380] sm:$0xff]
    %v311 = vld [vmem:[#allocation8 + $0x388] sm:$0xff]
    %v312 = vld [vmem:[#allocation8 + $0x390] sm:$0xff]
    %v313 = vld [vmem:[#allocation8 + $0x398] sm:$0xff]
    %v314 = vld [vmem:[#allocation8 + $0x3a0] sm:$0xff]
    %v315 = vld [vmem:[#allocation8 + $0x3a8] sm:$0xff]
    %v316 = vld [vmem:[#allocation8 + $0x3b0] sm:$0xff]
    %v317 = vld [vmem:[#allocation8 + $0x3b8] sm:$0xff]
    %v318 = vld [vmem:[#allocation8 + $0x3c0] sm:$0xff]
    %v319 = vld [vmem:[#allocation8 + $0x3c8] sm:$0xff]
    %v320 = vld [vmem:[#allocation8 + $0x3d0] sm:$0xff]
    %v321 = vld [vmem:[#allocation8 + $0x3d8] sm:$0xff]
    %v322 = vld [vmem:[#allocation8 + $0x3e0] sm:$0xff]
    %v323 = vld [vmem:[#allocation8 + $0x3e8] sm:$0xff]
    %v324 = vld [vmem:[#allocation8 + $0x3f0] sm:$0xff]
    %v325 = vld [vmem:[#allocation8 + $0x3f8] sm:$0xff]
    %v326 = vld [vmem:[#allocation10] sm:$0xf]
    %v328 = vperm.slane %v326, 0
    %v329 = vperm.slane %v326, 1
    %v330 = vperm.slane %v326, 2
    %v331 = vperm.slane %v326, 3
    %336 = vmatpush.msra.mxu0 %v258
    %337 = vmatpush.msra.mxu0 %v254
    %338 = vmatpush.msra.mxu0 %v250
    %339 = vmatpush.msra.mxu0 %v246
    %340 = vmatpush.msra.mxu0 %v242
    %341 = vmatpush.msra.mxu0 %v238
    %342 = vmatpush.msra.mxu0 %v234
    %343 = vmatpush.msra.mxu0 %v230
    %344 = vmatpush.msra.mxu0 %v226
    %345 = vmatpush.msra.mxu0 %v222
    %346 = vmatpush.msra.mxu0 %v218
    %347 = vmatpush.msra.mxu0 %v214
    %348 = vmatpush.msra.mxu0 %v210
    %349 = vmatpush.msra.mxu0 %v206
    %350 = vmatpush.msra.mxu0 %v202
    %351 = vmatpush.msra.mxu0 %v198
    %352 = vmatmul.f32.gmra.mxu0 %v194
    %v353 = vpop.f32.mrf.mxu0
    %v354 = vadd.f32 %v328, %v353
    %355 = vmatmul.f32.gmra.mxu0 %v196
    %v356 = vpop.f32.mrf.mxu0
    %v357 = vadd.f32 %v328, %v356
    %358 = vdwg.mxu0
    %359 = vmatpush.msra.mxu0 %v322
    %360 = vmatpush.msra.mxu0 %v318
    %361 = vmatpush.msra.mxu0 %v314
    %362 = vmatpush.msra.mxu0 %v310
    %363 = vmatpush.msra.mxu0 %v306
    %364 = vmatpush.msra.mxu0 %v302
    %365 = vmatpush.msra.mxu0 %v298
    %366 = vmatpush.msra.mxu0 %v294
    %367 = vmatpush.msra.mxu0 %v290
    %368 = vmatpush.msra.mxu0 %v286
    %369 = vmatpush.msra.mxu0 %v282
    %370 = vmatpush.msra.mxu0 %v278
    %371 = vmatpush.msra.mxu0 %v274
    %372 = vmatpush.msra.mxu0 %v270
    %373 = vmatpush.msra.mxu0 %v266
    %374 = vmatpush.msra.mxu0 %v262
    %375 = vmatmul.f32.gmra.mxu0 %v195
    %v376 = vpop.f32.mrf.mxu0
    %v377 = vadd.f32 %v354, %v376
    %378 = vmatmul.f32.gmra.mxu0 %v197
    %v379 = vpop.f32.mrf.mxu0
    %v380 = vadd.f32 %v357, %v379
    %381 = vdwg.mxu0
    %382 = vmatpush.msra.mxu0 %v259
    %383 = vmatpush.msra.mxu0 %v255
    %384 = vmatpush.msra.mxu0 %v251
    %385 = vmatpush.msra.mxu0 %v247
    %386 = vmatpush.msra.mxu0 %v243
    %387 = vmatpush.msra.mxu0 %v239
    %388 = vmatpush.msra.mxu0 %v235
    %389 = vmatpush.msra.mxu0 %v231
    %390 = vmatpush.msra.mxu0 %v227
    %391 = vmatpush.msra.mxu0 %v223
    %392 = vmatpush.msra.mxu0 %v219
    %393 = vmatpush.msra.mxu0 %v215
    %394 = vmatpush.msra.mxu0 %v211
    %395 = vmatpush.msra.mxu0 %v207
    %396 = vmatpush.msra.mxu0 %v203
    %397 = vmatpush.msra.mxu0 %v199
    %398 = vmatmul.f32.gmra.mxu0 %v194
    %v399 = vpop.f32.mrf.mxu0
    %v400 = vadd.f32 %v329, %v399
    %401 = vmatmul.f32.gmra.mxu0 %v196
    %v402 = vpop.f32.mrf.mxu0
    %v403 = vadd.f32 %v329, %v402
    %404 = vdwg.mxu0
    %405 = vmatpush.msra.mxu0 %v323
    %406 = vmatpush.msra.mxu0 %v319
    %407 = vmatpush.msra.mxu0 %v315
    %408 = vmatpush.msra.mxu0 %v311
    %409 = vmatpush.msra.mxu0 %v307
    %410 = vmatpush.msra.mxu0 %v303
    %411 = vmatpush.msra.mxu0 %v299
    %412 = vmatpush.msra.mxu0 %v295
    %413 = vmatpush.msra.mxu0 %v291
    %414 = vmatpush.msra.mxu0 %v287
    %415 = vmatpush.msra.mxu0 %v283
    %416 = vmatpush.msra.mxu0 %v279
    %417 = vmatpush.msra.mxu0 %v275
    %418 = vmatpush.msra.mxu0 %v271
    %419 = vmatpush.msra.mxu0 %v267
    %420 = vmatpush.msra.mxu0 %v263
    %421 = vmatmul.f32.gmra.mxu0 %v195
    %v422 = vpop.f32.mrf.mxu0
    %v423 = vadd.f32 %v400, %v422
    %424 = vmatmul.f32.gmra.mxu0 %v197
    %v425 = vpop.f32.mrf.mxu0
    %v426 = vadd.f32 %v403, %v425
    %427 = vdwg.mxu0
    %428 = vmatpush.msra.mxu0 %v260
    %429 = vmatpush.msra.mxu0 %v256
    %430 = vmatpush.msra.mxu0 %v252
    %431 = vmatpush.msra.mxu0 %v248
    %432 = vmatpush.msra.mxu0 %v244
    %433 = vmatpush.msra.mxu0 %v240
    %434 = vmatpush.msra.mxu0 %v236
    %435 = vmatpush.msra.mxu0 %v232
    %436 = vmatpush.msra.mxu0 %v228
    %437 = vmatpush.msra.mxu0 %v224
    %438 = vmatpush.msra.mxu0 %v220
    %439 = vmatpush.msra.mxu0 %v216
    %440 = vmatpush.msra.mxu0 %v212
    %441 = vmatpush.msra.mxu0 %v208
    %442 = vmatpush.msra.mxu0 %v204
    %443 = vmatpush.msra.mxu0 %v200
    %444 = vmatmul.f32.gmra.mxu0 %v194
    %v445 = vpop.f32.mrf.mxu0
    %v446 = vadd.f32 %v330, %v445
    %447 = vmatmul.f32.gmra.mxu0 %v196
    %v448 = vpop.f32.mrf.mxu0
    %v449 = vadd.f32 %v330, %v448
    %450 = vdwg.mxu0
    %451 = vmatpush.msra.mxu0 %v324
    %452 = vmatpush.msra.mxu0 %v320
    %453 = vmatpush.msra.mxu0 %v316
    %454 = vmatpush.msra.mxu0 %v312
    %455 = vmatpush.msra.mxu0 %v308
    %456 = vmatpush.msra.mxu0 %v304
    %457 = vmatpush.msra.mxu0 %v300
    %458 = vmatpush.msra.mxu0 %v296
    %459 = vmatpush.msra.mxu0 %v292
    %460 = vmatpush.msra.mxu0 %v288
    %461 = vmatpush.msra.mxu0 %v284
    %462 = vmatpush.msra.mxu0 %v280
    %463 = vmatpush.msra.mxu0 %v276
    %464 = vmatpush.msra.mxu0 %v272
    %465 = vmatpush.msra.mxu0 %v268
    %466 = vmatpush.msra.mxu0 %v264
    %467 = vmatmul.f32.gmra.mxu0 %v195
    %v468 = vpop.f32.mrf.mxu0
    %v469 = vadd.f32 %v446, %v468
    %470 = vmatmul.f32.gmra.mxu0 %v197
    %v471 = vpop.f32.mrf.mxu0
    %v472 = vadd.f32 %v449, %v471
    %473 = vdwg.mxu0
    %474 = vmatpush.msra.mxu0 %v261
    %475 = vmatpush.msra.mxu0 %v257
    %476 = vmatpush.msra.mxu0 %v253
    %477 = vmatpush.msra.mxu0 %v249
    %478 = vmatpush.msra.mxu0 %v245
    %479 = vmatpush.msra.mxu0 %v241
    %480 = vmatpush.msra.mxu0 %v237
    %481 = vmatpush.msra.mxu0 %v233
    %482 = vmatpush.msra.mxu0 %v229
    %483 = vmatpush.msra.mxu0 %v225
    %484 = vmatpush.msra.mxu0 %v221
    %485 = vmatpush.msra.mxu0 %v217
    %486 = vmatpush.msra.mxu0 %v213
    %487 = vmatpush.msra.mxu0 %v209
    %488 = vmatpush.msra.mxu0 %v205
    %489 = vmatpush.msra.mxu0 %v201
    %490 = vmatmul.f32.gmra.mxu0 %v194
    %v491 = vpop.f32.mrf.mxu0
    %v492 = vadd.f32 %v331, %v491
    %493 = vmatmul.f32.gmra.mxu0 %v196
    %v494 = vpop.f32.mrf.mxu0
    %v495 = vadd.f32 %v331, %v494
    %496 = vdwg.mxu0
    %497 = vmatpush.msra.mxu0 %v325
    %498 = vmatpush.msra.mxu0 %v321
    %499 = vmatpush.msra.mxu0 %v317
    %500 = vmatpush.msra.mxu0 %v313
    %501 = vmatpush.msra.mxu0 %v309
    %502 = vmatpush.msra.mxu0 %v305
    %503 = vmatpush.msra.mxu0 %v301
    %504 = vmatpush.msra.mxu0 %v297
    %505 = vmatpush.msra.mxu0 %v293
    %506 = vmatpush.msra.mxu0 %v289
    %507 = vmatpush.msra.mxu0 %v285
    %508 = vmatpush.msra.mxu0 %v281
    %509 = vmatpush.msra.mxu0 %v277
    %510 = vmatpush.msra.mxu0 %v273
    %511 = vmatpush.msra.mxu0 %v269
    %512 = vmatpush.msra.mxu0 %v265
    %513 = vmatmul.f32.gmra.mxu0 %v195
    %v514 = vpop.f32.mrf.mxu0
    %v515 = vadd.f32 %v492, %v514
    %516 = vmatmul.f32.gmra.mxu0 %v197
    %v517 = vpop.f32.mrf.mxu0
    %v518 = vadd.f32 %v495, %v517
    %519 = vdwg.mxu0
    %v520 = vmax.f32 %v377, 0.0
    %v521 = vmax.f32 %v423, 0.0
    %v522 = vmax.f32 %v469, 0.0
    %v523 = vmax.f32 %v515, 0.0
    %v524 = vmax.f32 %v380, 0.0
    %v525 = vmax.f32 %v426, 0.0
    %v526 = vmax.f32 %v472, 0.0
    %v527 = vmax.f32 %v518, 0.0
    %v528 = vld [vmem:[#allocation11] sm:$0xff]
    %v529 = vld [vmem:[#allocation11 + $0x8] sm:$0xff]
    %v530 = vld [vmem:[#allocation11 + $0x10] sm:$0xff]
    %v531 = vld [vmem:[#allocation11 + $0x18] sm:$0xff]
    %v532 = vld [vmem:[#allocation11 + $0x20] sm:$0xff]
    %v533 = vld [vmem:[#allocation11 + $0x28] sm:$0xff]
    %v534 = vld [vmem:[#allocation11 + $0x30] sm:$0xff]
    %v535 = vld [vmem:[#allocation11 + $0x38] sm:$0xff]
    %v536 = vld [vmem:[#allocation11 + $0x40] sm:$0xff]
    %v537 = vld [vmem:[#allocation11 + $0x48] sm:$0xff]
    %v538 = vld [vmem:[#allocation11 + $0x50] sm:$0xff]
    %v539 = vld [vmem:[#allocation11 + $0x58] sm:$0xff]
    %v540 = vld [vmem:[#allocation11 + $0x60] sm:$0xff]
    %v541 = vld [vmem:[#allocation11 + $0x68] sm:$0xff]
    %v542 = vld [vmem:[#allocation11 + $0x70] sm:$0xff]
    %v543 = vld [vmem:[#allocation11 + $0x78] sm:$0xff]
    %v544 = vld [vmem:[#allocation11 + $0x80] sm:$0xff]
    %v545 = vld [vmem:[#allocation11 + $0x88] sm:$0xff]
    %v546 = vld [vmem:[#allocation11 + $0x90] sm:$0xff]
    %v547 = vld [vmem:[#allocation11 + $0x98] sm:$0xff]
    %v548 = vld [vmem:[#allocation11 + $0xa0] sm:$0xff]
    %v549 = vld [vmem:[#allocation11 + $0xa8] sm:$0xff]
    %v550 = vld [vmem:[#allocation11 + $0xb0] sm:$0xff]
    %v551 = vld [vmem:[#allocation11 + $0xb8] sm:$0xff]
    %v552 = vld [vmem:[#allocation11 + $0xc0] sm:$0xff]
    %v553 = vld [vmem:[#allocation11 + $0xc8] sm:$0xff]
    %v554 = vld [vmem:[#allocation11 + $0xd0] sm:$0xff]
    %v555 = vld [vmem:[#allocation11 + $0xd8] sm:$0xff]
    %v556 = vld [vmem:[#allocation11 + $0xe0] sm:$0xff]
    %v557 = vld [vmem:[#allocation11 + $0xe8] sm:$0xff]
    %v558 = vld [vmem:[#allocation11 + $0xf0] sm:$0xff]
    %v559 = vld [vmem:[#allocation11 + $0xf8] sm:$0xff]
    %v560 = vld [vmem:[#allocation11 + $0x100] sm:$0xff]
    %v561 = vld [vmem:[#allocation11 + $0x108] sm:$0xff]
    %v562 = vld [vmem:[#allocation11 + $0x110] sm:$0xff]
    %v563 = vld [vmem:[#allocation11 + $0x118] sm:$0xff]
    %v564 = vld [vmem:[#allocation11 + $0x120] sm:$0xff]
    %v565 = vld [vmem:[#allocation11 + $0x128] sm:$0xff]
    %v566 = vld [vmem:[#allocation11 + $0x130] sm:$0xff]
    %v567 = vld [vmem:[#allocation11 + $0x138] sm:$0xff]
    %v568 = vld [vmem:[#allocation11 + $0x140] sm:$0xff]
    %v569 = vld [vmem:[#allocation11 + $0x148] sm:$0xff]
    %v570 = vld [vmem:[#allocation11 + $0x150] sm:$0xff]
    %v571 = vld [vmem:[#allocation11 + $0x158] sm:$0xff]
    %v572 = vld [vmem:[#allocation11 + $0x160] sm:$0xff]
    %v573 = vld [vmem:[#allocation11 + $0x168] sm:$0xff]
    %v574 = vld [vmem:[#allocation11 + $0x170] sm:$0xff]
    %v575 = vld [vmem:[#allocation11 + $0x178] sm:$0xff]
    %v576 = vld [vmem:[#allocation11 + $0x180] sm:$0xff]
    %v577 = vld [vmem:[#allocation11 + $0x188] sm:$0xff]
    %v578 = vld [vmem:[#allocation11 + $0x190] sm:$0xff]
    %v579 = vld [vmem:[#allocation11 + $0x198] sm:$0xff]
    %v580 = vld [vmem:[#allocation11 + $0x1a0] sm:$0xff]
    %v581 = vld [vmem:[#allocation11 + $0x1a8] sm:$0xff]
    %v582 = vld [vmem:[#allocation11 + $0x1b0] sm:$0xff]
    %v583 = vld [vmem:[#allocation11 + $0x1b8] sm:$0xff]
    %v584 = vld [vmem:[#allocation11 + $0x1c0] sm:$0xff]
    %v585 = vld [vmem:[#allocation11 + $0x1c8] sm:$0xff]
    %v586 = vld [vmem:[#allocation11 + $0x1d0] sm:$0xff]
    %v587 = vld [vmem:[#allocation11 + $0x1d8] sm:$0xff]
    %v588 = vld [vmem:[#allocation11 + $0x1e0] sm:$0xff]
    %v589 = vld [vmem:[#allocation11 + $0x1e8] sm:$0xff]
    %v590 = vld [vmem:[#allocation11 + $0x1f0] sm:$0xff]
    %v591 = vld [vmem:[#allocation11 + $0x1f8] sm:$0xff]
    %v592 = vld [vmem:[%s6] sm:$0x1]
    %v594 = vperm.slane %v592, 0
    %596 = vmatpush.msra.mxu0 %v543
    %597 = vmatpush.msra.mxu0 %v542
    %598 = vmatpush.msra.mxu0 %v541
    %599 = vmatpush.msra.mxu0 %v540
    %600 = vmatpush.msra.mxu0 %v539
    %601 = vmatpush.msra.mxu0 %v538
    %602 = vmatpush.msra.mxu0 %v537
    %603 = vmatpush.msra.mxu0 %v536
    %604 = vmatpush.msra.mxu0 %v535
    %605 = vmatpush.msra.mxu0 %v534
    %606 = vmatpush.msra.mxu0 %v533
    %607 = vmatpush.msra.mxu0 %v532
    %608 = vmatpush.msra.mxu0 %v531
    %609 = vmatpush.msra.mxu0 %v530
    %610 = vmatpush.msra.mxu0 %v529
    %611 = vmatpush.msra.mxu0 %v528
    %612 = vmatmul.f32.gmra.mxu0 %v520
    %v613 = vpop.f32.mrf.mxu0
    %v614 = vadd.f32 %v594, %v613
    %615 = vmatmul.f32.gmra.mxu0 %v524
    %v616 = vpop.f32.mrf.mxu0
    %v617 = vadd.f32 %v594, %v616
    %618 = vdwg.mxu0
    %619 = vmatpush.msra.mxu0 %v559
    %620 = vmatpush.msra.mxu0 %v558
    %621 = vmatpush.msra.mxu0 %v557
    %622 = vmatpush.msra.mxu0 %v556
    %623 = vmatpush.msra.mxu0 %v555
    %624 = vmatpush.msra.mxu0 %v554
    %625 = vmatpush.msra.mxu0 %v553
    %626 = vmatpush.msra.mxu0 %v552
    %627 = vmatpush.msra.mxu0 %v551
    %628 = vmatpush.msra.mxu0 %v550
    %629 = vmatpush.msra.mxu0 %v549
    %630 = vmatpush.msra.mxu0 %v548
    %631 = vmatpush.msra.mxu0 %v547
    %632 = vmatpush.msra.mxu0 %v546
    %633 = vmatpush.msra.mxu0 %v545
    %634 = vmatpush.msra.mxu0 %v544
    %635 = vmatmul.f32.gmra.mxu0 %v521
    %v636 = vpop.f32.mrf.mxu0
    %v637 = vadd.f32 %v614, %v636
    %638 = vmatmul.f32.gmra.mxu0 %v525
    %v639 = vpop.f32.mrf.mxu0
    %v640 = vadd.f32 %v617, %v639
    %641 = vdwg.mxu0
    %642 = vmatpush.msra.mxu0 %v575
    %643 = vmatpush.msra.mxu0 %v574
    %644 = vmatpush.msra.mxu0 %v573
    %645 = vmatpush.msra.mxu0 %v572
    %646 = vmatpush.msra.mxu0 %v571
    %647 = vmatpush.msra.mxu0 %v570
    %648 = vmatpush.msra.mxu0 %v569
    %649 = vmatpush.msra.mxu0 %v568
    %650 = vmatpush.msra.mxu0 %v567
    %651 = vmatpush.msra.mxu0 %v566
    %652 = vmatpush.msra.mxu0 %v565
    %653 = vmatpush.msra.mxu0 %v564
    %654 = vmatpush.msra.mxu0 %v563
    %655 = vmatpush.msra.mxu0 %v562
    %656 = vmatpush.msra.mxu0 %v561
    %657 = vmatpush.msra.mxu0 %v560
    %658 = vmatmul.f32.gmra.mxu0 %v522
    %v659 = vpop.f32.mrf.mxu0
    %v660 = vadd.f32 %v637, %v659
    %661 = vmatmul.f32.gmra.mxu0 %v526
    %v662 = vpop.f32.mrf.mxu0
    %v663 = vadd.f32 %v640, %v662
    %664 = vdwg.mxu0
    %665 = vmatpush.msra.mxu0 %v591
    %666 = vmatpush.msra.mxu0 %v590
    %667 = vmatpush.msra.mxu0 %v589
    %668 = vmatpush.msra.mxu0 %v588
    %669 = vmatpush.msra.mxu0 %v587
    %670 = vmatpush.msra.mxu0 %v586
    %671 = vmatpush.msra.mxu0 %v585
    %672 = vmatpush.msra.mxu0 %v584
    %673 = vmatpush.msra.mxu0 %v583
    %674 = vmatpush.msra.mxu0 %v582
    %675 = vmatpush.msra.mxu0 %v581
    %676 = vmatpush.msra.mxu0 %v580
    %677 = vmatpush.msra.mxu0 %v579
    %678 = vmatpush.msra.mxu0 %v578
    %679 = vmatpush.msra.mxu0 %v577
    %680 = vmatpush.msra.mxu0 %v576
    %681 = vmatmul.f32.gmra.mxu0 %v523
    %v682 = vpop.f32.mrf.mxu0
    %v683 = vadd.f32 %v660, %v682
    %684 = vmatmul.f32.gmra.mxu0 %v527
    %v685 = vpop.f32.mrf.mxu0
    %v686 = vadd.f32 %v663, %v685
    %687 = vdwg.mxu0
    %v688 = vxor.u32 %v683, 2147483648
    %v689 = vxor.u32 %v686, 2147483648
    %v690 = vmul.f32 %v688, 1.442695
    %v691 = vpow.pop %v690
    %v692 = vmul.f32 %v689, 1.442695
    %v693 = vpow.pop %v692
    %v694 = vadd.f32 %v691, 1.0
    %v695 = vadd.f32 %v693, 1.0
    %v696 = vrcp.pop %v694
    %v697 = vmul.f32 %v694, %v696
    %v698 = vsub.f32 1.0, %v697
    %v699 = vmul.f32 %v696, %v698
    %v700 = vadd.f32 %v696, %v699
    %vm701 = vweird.f32 %v694
    %vm702 = vweird.f32 %v696
    %vm703 = vmor %vm701, %vm702
    %v704 = vsel %vm703, %v696, %v700
    %v705 = vand.u32 2147483647, %v694
    %vm706 = vcmp.eq.f32.partialorder %v705, 8.507059e+37
    %v707 = vand.u32 %v694, 2147483648
    %v708 = vor.u32 1.1754944e-38, %v707
    %v709 = vsel %vm706, %v708, %v704
    %v710 = vmul.f32 1.0, %v709
    %v711 = vrcp.pop %v695
    %v712 = vmul.f32 %v695, %v711
    %v713 = vsub.f32 1.0, %v712
    %v714 = vmul.f32 %v711, %v713
    %v715 = vadd.f32 %v711, %v714
    %vm716 = vweird.f32 %v695
    %vm717 = vweird.f32 %v711
    %vm718 = vmor %vm716, %vm717
    %v719 = vsel %vm718, %v711, %v715
    %v720 = vand.u32 2147483647, %v695
    %vm721 = vcmp.eq.f32.partialorder %v720, 8.507059e+37
    %v722 = vand.u32 %v695, 2147483648
    %v723 = vor.u32 1.1754944e-38, %v722
    %v724 = vsel %vm721, %v723, %v719
    %v725 = vmul.f32 1.0, %v724
    %726 = vst [vmem:[#allocation13] sm:$0xff] %v710
    %727 = vst [vmem:[#allocation13 + $0x8] sm:$0xff] %v725
    // Predicated region
    $region54: #{decoder_forward.1} parent=1 // pred_check
      _
    $region55: #{decoder_forward.1} parent=1 // pred_check_branch
      %729 = sbr.rel (0) target = $region57
    $region56: #{decoder_forward.1} parent=1 // pred_region
      %731 = vsyncadd [#allocation4], 0
      %s732 = sshll.u32 [#allocation13], 4
      %s733 = int_to_ptr.vmem [resolvable:$true] %s732
      %s734 = sshll.u32 %s7, 4
      %s735 = int_to_ptr.hbm [resolvable:$true] %s734
      %740 = dma.vmem_to_hbm [thread:$0]  %s733, 256, %s735, [#allocation4], 128, 128, 8
    $region57: #{decoder_forward.1} parent=1 // pred_fallthru
      _
    // Predicated region
    $region58: #{decoder_forward.1} parent=1 // pred_check
      _
    $region59: #{decoder_forward.1} parent=1 // pred_check_branch
      %742 = sbr.rel (0) target = $region61
    $region60: #{decoder_forward.1} parent=1 // pred_region
      %744 = dma.done [#allocation4], 256
    $region61: #{decoder_forward.1} parent=1 // pred_fallthru
      _
    %745 = vsyncpa [#allocation3], 1
    %746 = vsyncpa [#allocation6], 1
    %747 = vsyncpa [#allocation9], 1
    %748 = vsyncpa [#allocation12], 1
    %749 = vsyncpa [#allocation4], 1

</llo_original>
